<compile_context>
chip_gen: v6e
topology: v6e:2x2x1
jax: 0.10.0
libtpu: 0.0.40
codegen_flags: <defaults>
</compile_context>

<pallas_src>
import jax
import jax.numpy as jnp
from jax.experimental import pallas as pl
from jax.experimental.pallas import tpu as pltpu


def _h_swish_kernel(x_ref, o_ref):
    x = x_ref[...]
    # x * relu6(x + 3) / 6  ==  x * clamp(x + 3, 0, 6) / 6   (matches the ref formula)
    o_ref[...] = (x * (jnp.clip(x + 3.0, 0.0, 6.0) / 6.0)).astype(o_ref.dtype)


def h_swish(x: jax.Array, *, target_block_bytes: int = 4 * 1024 * 1024) -> jax.Array:
    """Elementwise hard-swish via Pallas. Accepts any shape (NCHW expected)."""
    orig_shape = x.shape
    dtype = x.dtype
    total = x.size
    itemsize = jnp.dtype(dtype).itemsize

    LANE = 128
    # sublane packing factor: f32 -> 8, bf16 -> 16, int8/fp8 -> 32
    sublane = max(8, 32 // itemsize)

    # ---- copy-free 2-D factorization (rows, cols) -----------------------------
    # Pad only as a last resort (total not a multiple of 128). Zero-padding is
    # semantically safe (h_swish(0) == 0) and the pad tail is sliced off below.
    padded_total = total
    if total % LANE != 0:
        padded_total = ((total + LANE - 1) // LANE) * LANE

    x_flat = x.reshape(-1)
    if padded_total != total:
        x_flat = jnp.pad(x_flat, (0, padded_total - total))

    # Wide, lane-dense last dim (multiple of 128) that divides the flat length,
    # while keeping at least `sublane` rows for full sublane utilization.
    cols = LANE
    for cand in (2048, 1024, 512, 256):
        if padded_total % cand == 0 and padded_total // cand >= sublane:
            cols = cand
            break
    rows = padded_total // cols
    x2d = x_flat.reshape(rows, cols)

    # ---- block size: multi-MiB tiles, dtype-aware sublane multiple ------------
    max_block_rows = max(
        sublane, (target_block_bytes // (cols * itemsize)) // sublane * sublane
    )
    if rows <= max_block_rows:
        block_rows = rows  # single block == full extent (always a legal block)
    else:
        block_rows = max_block_rows  # cdiv grid; partial last block is masked
    grid = (pl.cdiv(rows, block_rows),)

    out2d = pl.pallas_call(
        _h_swish_kernel,
        out_shape=jax.ShapeDtypeStruct((rows, cols), dtype),
        grid_spec=pltpu.PrefetchScalarGridSpec(
            num_scalar_prefetch=0,
            grid=grid,
            in_specs=[pl.BlockSpec((block_rows, cols), lambda i: (i, 0))],
            out_specs=pl.BlockSpec((block_rows, cols), lambda i: (i, 0)),
        ),
        # Elementwise: output may reuse the input's HBM buffer.
        input_output_aliases={0: 0},
        compiler_params=pltpu.CompilerParams(
            dimension_semantics=("parallel",),      # shard 1-D grid across TCs
            vmem_limit_bytes=32 * 1024 * 1024,      # safe on v5e/v6e/v7x
        ),
    )(x2d)

    if padded_total != total:
        return out2d.reshape(-1)[:total].reshape(orig_shape)
    return out2d.reshape(orig_shape)


def _h_swish_ref(x):
    return x * jnp.clip(x + 3.0, 0.0, 6.0) / 6.0


if __name__ == "__main__":
    key = jax.random.PRNGKey(0)

    # Primary case: NCHW activation shape from the module's forward.
    x = jax.random.normal(key, (2, 4, 16, 16), dtype=jnp.float32) * 4.0
    y_ref = _h_swish_ref(x)                 # compute ref before kernel call
    y = jax.block_until_ready(h_swish(x))
    assert y.shape == x.shape and y.dtype == x.dtype
    assert jnp.allclose(y, y_ref, atol=1e-6, rtol=1e-6), "mismatch vs reference"

    # Odd-sized shape: exercises the (last-resort) pad + unpad path.
    x2 = jax.random.normal(jax.random.PRNGKey(1), (1, 3, 15, 15), jnp.float32) * 4.0
    y2_ref = _h_swish_ref(x2)
    y2 = jax.block_until_ready(h_swish(x2))
    assert y2.shape == x2.shape and jnp.allclose(y2, y2_ref, atol=1e-6, rtol=1e-6)

    # Non-divisible row count with a small block override: exercises the
    # cdiv grid / masked partial-last-block path.
    x3 = jax.random.normal(jax.random.PRNGKey(2), (2, 8, 56, 56), jnp.float32) * 4.0
    y3_ref = _h_swish_ref(x3)
    y3 = jax.block_until_ready(h_swish(x3, target_block_bytes=64 * 1024))
    assert y3.shape == x3.shape and jnp.allclose(y3, y3_ref, atol=1e-6, rtol=1e-6)

    print("KERNEL_OK")
</pallas_src>

<mosaic_0001>
module attributes {stable_mosaic.version = 11 : i64} {
  func.func @_h_swish_kernel(%arg0: i32, %arg1: memref<8x256xf32, #tpu.memory_space<vmem>>, %arg2: memref<8x256xf32, #tpu.memory_space<vmem>>) attributes {dimension_semantics = [#tpu.dimension_semantics<parallel>], iteration_bounds = array<i64: 1>, scalar_prefetch = 0 : i64, scratch_operands = 0 : i64, tpu.core_type = #tpu.core_type<tc>, window_params = [{transform_indices = @transform_0, window_bounds = array<i64: 8, 256>}, {transform_indices = @transform_1, window_bounds = array<i64: 8, 256>}]} {
    %c0 = arith.constant 0 : index
    %c0_0 = arith.constant 0 : index
    %0 = vector.load %arg1[%c0, %c0_0] : memref<8x256xf32, #tpu.memory_space<vmem>>, vector<8x256xf32>
    %cst = arith.constant 3.000000e+00 : f32
    %1 = vector.broadcast %cst : f32 to vector<8x256xf32>
    %2 = arith.addf %0, %1 : vector<8x256xf32>
    %cst_1 = arith.constant 0.000000e+00 : f32
    %cst_2 = arith.constant 6.000000e+00 : f32
    %3 = vector.broadcast %cst_1 : f32 to vector<8x256xf32>
    %4 = arith.maximumf %3, %2 : vector<8x256xf32>
    %5 = vector.broadcast %cst_2 : f32 to vector<8x256xf32>
    %6 = arith.minimumf %5, %4 : vector<8x256xf32>
    %cst_3 = arith.constant 6.000000e+00 : f32
    %7 = vector.broadcast %cst_3 : f32 to vector<8x256xf32>
    %8 = arith.divf %6, %7 : vector<8x256xf32>
    %9 = arith.mulf %0, %8 : vector<8x256xf32>
    %c0_4 = arith.constant 0 : index
    %c0_5 = arith.constant 0 : index
    %10 = vector.load %arg2[%c0_4, %c0_5] : memref<8x256xf32, #tpu.memory_space<vmem>>, vector<8x256xf32>
    tpu.vector_store %arg2[%c0_4, %c0_5], %9 {strides = array<i32>} : memref<8x256xf32, #tpu.memory_space<vmem>>, vector<8x256xf32>,
    return
  }
  func.func @transform_0(%arg0: i32) -> (i32, i32) {
    %c0_i32 = arith.constant 0 : i32
    %c0_i32_0 = arith.constant 0 : i32
    return %arg0, %c0_i32 : i32, i32
  }
  func.func @transform_1(%arg0: i32) -> (i32, i32) {
    %c0_i32 = arith.constant 0 : i32
    %c0_i32_0 = arith.constant 0 : i32
    return %arg0, %c0_i32 : i32, i32
  }
}

</mosaic_0001>

<llo_original>
// kernel: tpu_custom_call.1
$region0: #{tpu_custom_call.1}
  #allocation0 [shape = 'u32[]', space=smem, size = 0x4, offset = 0x4, fixed_abs, tag = 'smem constant byte address 0x4 - core index']
  #allocation1 [shape = 'u32[144,128]{1,0:T(1,128)}', space=vmem, size = 0x12000, scoped, tag = 'internal scratch']
  %s0 = inlined_call_operand.hbm [shape: f32[8,256], index: 0, kind: input, shape index: {}, may-alias: {0,1}]
  %s1 = inlined_call_operand.hbm [shape: f32[8,256], index: 1, kind: output, shape index: {}, may-alias: {0,1}]
  %s2 = sld [smem:[#allocation0]]
  $region18: #{tpu_custom_call.1} parent=0
    _
  %s4 = ssub.s32 1, %s2
  %s5 = scalar_select 0, %s4, %s2
  $region1: #{tpu_custom_call.1} parent=0
    #allocation2 [shape = 'u8[8192]{0}', space=vmem, size = 0x2000, scoped, tag = 'input window, operand 0, single buffered']
    #allocation3 [shape = 's32[1]{0}', space=sflag, size = 0x4, scoped, tag = 'scoped memory for tpu_custom_call.1']
    #allocation4 [shape = 's32[1]{0}', space=sflag, size = 0x4, scoped, tag = 'scoped memory for tpu_custom_call.1']
    #allocation5 [shape = 'u8[8192]{0}', space=vmem, size = 0x2000, scoped, tag = 'output window, operand 0, single buffered']
    %6 = vsyncpa [#allocation3], 0
    %7 = vsyncpa [#allocation4], 0
    // Predicated region
    $region2: #{tpu_custom_call.1} parent=1 // pred_check
      _
    $region3: #{tpu_custom_call.1} parent=1 // pred_check_branch
      %9 = sbr.rel (0) target = $region5
    $region4: #{tpu_custom_call.1} parent=1 // pred_region
      %s11 = ssub.s32 256, 256
      %12 = vsyncadd [#allocation3], %s11
      %s14 = sshll.u32 [#allocation2], 4
      %s15 = int_to_ptr.vmem [resolvable:$true] %s14
      %17 = dma.hbm_to_vmem [thread:$0]  %s0, 256, %s15, [#allocation3]
    $region5: #{tpu_custom_call.1} parent=1 // pred_fallthru
      _
    // Predicated region
    $region6: #{tpu_custom_call.1} parent=1 // pred_check
      _
    $region7: #{tpu_custom_call.1} parent=1 // pred_check_branch
      %19 = sbr.rel (0) target = $region9
    $region8: #{tpu_custom_call.1} parent=1 // pred_region
      %20 = dma.done [#allocation3], 256
    $region9: #{tpu_custom_call.1} parent=1 // pred_fallthru
      _
    %v21 = vld [vmem:[#allocation2] sm:$0xff]
    %v22 = vld [vmem:[#allocation2 + $0x8] sm:$0xff]
    %v23 = vadd.f32 %v21, 3.0
    %v24 = vadd.f32 %v22, 3.0
    %v25 = vmax.f32 %v23, 0.0
    %v26 = vmax.f32 %v24, 0.0
    %v27 = vmin.f32 %v25, 6.0
    %v28 = vmin.f32 %v26, 6.0
    %v29 = vrcp.pop 6.0
    %v30 = vmul.f32 %v27, %v29
    %v31 = vmul.f32 %v28, %v29
    %v32 = vmul.f32 %v21, %v30
    %v33 = vmul.f32 %v22, %v31
    %34 = vst [vmem:[#allocation5] sm:$0xff] %v32
    %35 = vst [vmem:[#allocation5 + $0x8] sm:$0xff] %v33
    // Predicated region
    $region10: #{tpu_custom_call.1} parent=1 // pred_check
      _
    $region11: #{tpu_custom_call.1} parent=1 // pred_check_branch
      %37 = sbr.rel (0) target = $region13
    $region12: #{tpu_custom_call.1} parent=1 // pred_region
      %s39 = ssub.s32 256, 256
      %40 = vsyncadd [#allocation4], %s39
      %s42 = sshll.u32 [#allocation5], 4
      %s43 = int_to_ptr.vmem [resolvable:$true] %s42
      %45 = dma.vmem_to_hbm [thread:$0]  %s43, 256, %s1, [#allocation4]
    $region13: #{tpu_custom_call.1} parent=1 // pred_fallthru
      _
    // Predicated region
    $region14: #{tpu_custom_call.1} parent=1 // pred_check
      _
    $region15: #{tpu_custom_call.1} parent=1 // pred_check_branch
      %47 = sbr.rel (0) target = $region17
    $region16: #{tpu_custom_call.1} parent=1 // pred_region
      %48 = dma.done [#allocation4], 256
    $region17: #{tpu_custom_call.1} parent=1 // pred_fallthru
      _
    %49 = vsyncpa [#allocation3], 1
    %50 = vsyncpa [#allocation4], 1

</llo_original>
